<compile_context>
chip_gen: v6e
topology: v6e:2x2x1
jax: 0.10.0
libtpu: 0.0.40
codegen_flags: <defaults>
</compile_context>

<pallas_src>
import functools

import jax
import jax.numpy as jnp
from jax import lax
from jax.experimental import pallas as pl
from jax.experimental.pallas import tpu as pltpu


def _round_up(x, m):
    return ((x + m - 1) // m) * m


# ---------------------------------------------------------------------------
# Path A (sparse): gather only labelled rows' logits from HBM.
# ---------------------------------------------------------------------------

def _gather_ce_kernel(row_idx_ref, labels_ref, scores_hbm, out_ref, buf, sem,
                      *, rows_per_block, rows_per_chunk):
    """Sum of per-row cross-entropy over one block of gathered rows.

    grid = (num_row_blocks,)  -- row blocks are independent ("parallel", megacore-safe).
      row_idx_ref: SMEM int32[capacity]   (scalar prefetch) global row index per gathered row
      labels_ref:  VMEM (rows_per_block, 1) int32 gathered labels (-1 = ignore / padding)
      scores_hbm:  ANY   (N, V) logits, gathered row-by-row with manual DMAs
      out_ref:     VMEM (8, 128) f32; the block's loss sum is written at [0, 0], zeros elsewhere
      buf:         VMEM (2, rows_per_chunk, V) double-buffered staging buffer
      sem:         DMA semaphores, one per buffer slot
    """
    blk = pl.program_id(0)
    base = blk * rows_per_block
    num_chunks = rows_per_block // rows_per_chunk

    def start_chunk(c, slot):
        # One DMA per gathered row (rows are not contiguous in HBM).
        for j in range(rows_per_chunk):
            row = row_idx_ref[base + c * rows_per_chunk + j]
            pltpu.make_async_copy(
                scores_hbm.at[pl.ds(row, 1), :],
                buf.at[slot, pl.ds(j, 1), :],
                sem.at[slot],
            ).start()

    def wait_chunk(slot):
        # Per-copy waits: robust regardless of the semaphore's completion accounting.
        for j in range(rows_per_chunk):
            pltpu.make_async_copy(
                scores_hbm.at[pl.ds(0, 1), :],
                buf.at[slot, pl.ds(j, 1), :],
                sem.at[slot],
            ).wait()

    # Prime the pipeline (every block primes itself -> no cross-block state, megacore-safe).
    start_chunk(0, 0)

    acc = jnp.zeros((1, 1), jnp.float32)
    for c in range(num_chunks):
        slot = c % 2
        # Issue the next chunk's DMAs before blocking on the current one.
        if c + 1 < num_chunks:
            start_chunk(c + 1, 1 - slot)
        wait_chunk(slot)

        s = buf[slot].astype(jnp.float32)                                 # (R, V)
        lbl = labels_ref[pl.ds(c * rows_per_chunk, rows_per_chunk), :]    # (R, 1) int32

        # Whole row is resident: plain (not online) logsumexp + log-domain label pick.
        m = jnp.max(s, axis=-1, keepdims=True)
        lse = m + jnp.log(jnp.sum(jnp.exp(s - m), axis=-1, keepdims=True))
        col = lax.broadcasted_iota(jnp.int32, s.shape, 1)
        s_label = jnp.sum(jnp.where(col == lbl, s, 0.0), axis=-1, keepdims=True)
        per_row = jnp.where(lbl != -1, lse - s_label, 0.0)                # (R, 1)
        acc = acc + jnp.sum(per_row, axis=0, keepdims=True)

    # Lane-dense (8,128) writeback; only [0, 0] carries the block's loss sum.
    ii = lax.broadcasted_iota(jnp.int32, (8, 128), 0)
    jj = lax.broadcasted_iota(jnp.int32, (8, 128), 1)
    out_ref[...] = jnp.where((ii == 0) & (jj == 0),
                             jnp.broadcast_to(acc, (8, 128)), 0.0)


def _choose_gather_tiles(capacity, n_classes, itemsize):
    # rows per DMA chunk: enough rows in flight to hide DMA latency behind the per-row
    # VPU work, bounded so the 2-deep staging buffer stays ~<= 16 MiB (safe on v7x's 64 MiB).
    lane_c = _round_up(n_classes, 128)
    staging_budget = 16 << 20
    r = min(32, max(1, staging_budget // max(1, 2 * lane_c * itemsize)), capacity)
    if r >= 8:
        r = (r // 8) * 8  # keep the (R, V) compute tile sublane-friendly
    # rows per grid block: multiple of r; target >= ~4 blocks so both v7x TCs get work,
    # but keep blocks large enough to amortize the un-overlapped first-chunk DMA.
    chunks_per_block = max(1, min(8, pl.cdiv(capacity, 4 * r)))
    return r * chunks_per_block, r


def _mlm_ce_sum_gather(scores, labels_flat, max_valid_rows,
                       rows_per_block=None, rows_per_chunk=None):
    """Sum of per-row CE over labelled rows only (reads only those rows' logits)."""
    N, C = scores.shape
    capacity = int(min(max(int(max_valid_rows), 1), N))

    auto_tn, auto_r = _choose_gather_tiles(capacity, C, scores.dtype.itemsize)
    rows_per_block = auto_tn if rows_per_block is None else int(rows_per_block)
    rows_per_chunk = auto_r if rows_per_chunk is None else int(rows_per_chunk)
    assert rows_per_chunk >= 1 and rows_per_block % rows_per_chunk == 0

    capacity_p = _round_up(capacity, rows_per_block)
    num_blocks = capacity_p // rows_per_block

    # Compact the valid row indices in JAX (tiny int work); pad with row 0 / label -1.
    # NOTE: if the true number of labelled rows exceeds `max_valid_rows`, the extras are
    # dropped from the numerator (caller should pass B * max_predictions_per_seq).
    valid = labels_flat != -1
    num_valid = jnp.sum(valid.astype(jnp.int32))
    take = min(capacity_p, N)
    idx = jnp.nonzero(valid, size=take, fill_value=0)[0].astype(jnp.int32)
    if capacity_p > take:
        idx = jnp.concatenate([idx, jnp.zeros((capacity_p - take,), jnp.int32)])
    pos = jnp.arange(capacity_p, dtype=jnp.int32)
    g_labels = jnp.where(pos < jnp.minimum(num_valid, take),
                         labels_flat[idx], jnp.int32(-1)).reshape(capacity_p, 1)

    buf_bytes = 2 * rows_per_chunk * _round_up(C, 128) * scores.dtype.itemsize
    vmem_limit = int(max(32 << 20, buf_bytes + (8 << 20)))

    out = pl.pallas_call(
        functools.partial(_gather_ce_kernel,
                          rows_per_block=rows_per_block,
                          rows_per_chunk=rows_per_chunk),
        out_shape=jax.ShapeDtypeStruct((num_blocks * 8, 128), jnp.float32),
        grid_spec=pltpu.PrefetchScalarGridSpec(
            num_scalar_prefetch=1,
            grid=(num_blocks,),
            in_specs=[
                pl.BlockSpec((rows_per_block, 1), lambda b, idx_ref: (b, 0)),
                pl.BlockSpec(memory_space=pl.ANY),   # raw logits, gathered manually
            ],
            out_specs=pl.BlockSpec((8, 128), lambda b, idx_ref: (b, 0)),
            scratch_shapes=[
                pltpu.VMEM((2, rows_per_chunk, C), scores.dtype),
                pltpu.SemaphoreType.DMA((2,)),
            ],
        ),
        compiler_params=pltpu.CompilerParams(
            dimension_semantics=("parallel",),
            vmem_limit_bytes=vmem_limit,
        ),
    )(idx, g_labels, scores)
    return jnp.sum(out)


# ---------------------------------------------------------------------------
# Path B (dense fallback): stream all rows, online logsumexp over class tiles.
# ---------------------------------------------------------------------------

def _dense_ce_kernel(scores_ref, labels_ref, loss_ref, m_sc, l_sc, pick_sc, *, num_classes):
    """Per-row CE; grid = (row_tiles, class_tiles), class axis is the reduction."""
    kc = pl.program_id(1)
    tc = scores_ref.shape[1]

    @pl.when(kc == 0)
    def _():
        m_sc[...] = jnp.full_like(m_sc, -jnp.inf)
        l_sc[...] = jnp.zeros_like(l_sc)
        pick_sc[...] = jnp.zeros_like(pick_sc)

    s = scores_ref[...].astype(jnp.float32)                # (TN, TC)
    labels = labels_ref[...]                               # (TN, 1) int32
    local_col = lax.broadcasted_iota(jnp.int32, s.shape, 1)

    # Log-domain label pick: the label falls in exactly one class tile, so a plain +=
    # (no rescale, no exp-underflow).  Compare against the scalar-shifted label instead
    # of materializing a full-tile global-column add.
    pick_sc[...] += jnp.sum(
        jnp.where(local_col == (labels - kc * tc), s, 0.0), axis=1, keepdims=True)

    if num_classes % tc != 0:
        # Last class tile hangs past V: mask padding columns out of the softmax.
        # Scalar threshold (no global-column add); the select still runs on every tile.
        s = jnp.where(local_col < (num_classes - kc * tc), s, -jnp.inf)

    m_prev = m_sc[...]
    m_new = jnp.maximum(m_prev, jnp.max(s, axis=1, keepdims=True))
    l_sc[...] = l_sc[...] * jnp.exp(m_prev - m_new) + jnp.sum(
        jnp.exp(s - m_new), axis=1, keepdims=True)
    m_sc[...] = m_new

    @pl.when(kc == pl.num_programs(1) - 1)
    def _():
        valid = labels != -1
        loss_ref[...] = jnp.where(
            valid, m_sc[...] + jnp.log(l_sc[...]) - pick_sc[...], 0.0)


def _choose_dense_tiles(n_rows, n_classes):
    # 512 x 4096 f32 tile = 8 MiB, 16 MiB double-buffered: near the HBM roofline on
    # v5e/v6e and comfortably inside v7x's 64 MiB VMEM.
    tn = min(512, _round_up(n_rows, 16))
    tc = min(4096, _round_up(n_classes, 128))
    return tn, tc


def _mlm_ce_sum_dense(scores, labels_flat, tile_rows=None, tile_classes=None):
    """Sum of per-row CE over all rows (ignore_index rows contribute 0)."""
    N, C = scores.shape
    auto_tn, auto_tc = _choose_dense_tiles(N, C)
    tn = auto_tn if tile_rows is None else int(tile_rows)
    tc = auto_tc if tile_classes is None else int(tile_classes)

    labels2d = labels_flat.reshape(N, 1)
    itemsize = scores.dtype.itemsize
    vmem_bytes = 2 * tn * tc * itemsize + 8 * tn * 4
    vmem_limit = int(max(vmem_bytes + (8 << 20), 32 << 20))

    loss = pl.pallas_call(
        functools.partial(_dense_ce_kernel, num_classes=C),
        out_shape=jax.ShapeDtypeStruct((N, 1), jnp.float32),
        grid_spec=pltpu.PrefetchScalarGridSpec(
            num_scalar_prefetch=0,
            grid=(pl.cdiv(N, tn), pl.cdiv(C, tc)),
            in_specs=[
                pl.BlockSpec((tn, tc), lambda i, k: (i, k)),
                pl.BlockSpec((tn, 1), lambda i, k: (i, 0)),
            ],
            out_specs=pl.BlockSpec((tn, 1), lambda i, k: (i, 0)),
            scratch_shapes=[
                pltpu.VMEM((tn, 1), jnp.float32),  # running max
                pltpu.VMEM((tn, 1), jnp.float32),  # running sum-exp
                pltpu.VMEM((tn, 1), jnp.float32),  # label logit (log domain)
            ],
        ),
        compiler_params=pltpu.CompilerParams(
            dimension_semantics=("parallel", "arbitrary"),
            vmem_limit_bytes=vmem_limit,
        ),
    )(scores, labels2d)
    return jnp.sum(loss)


# ---------------------------------------------------------------------------
# Tiny NSP loss (B, 2): plain JAX, not worth a kernel launch.
# ---------------------------------------------------------------------------

def _cross_entropy_mean_jax(scores, labels):
    scores = scores.astype(jnp.float32)
    labels = labels.astype(jnp.int32)
    lse = jax.nn.logsumexp(scores, axis=-1)
    picked = jnp.take_along_axis(scores, jnp.maximum(labels, 0)[:, None], axis=-1)[:, 0]
    valid = labels != -1
    per_row = jnp.where(valid, lse - picked, 0.0)
    return jnp.sum(per_row) / jnp.sum(valid.astype(jnp.float32))


# ---------------------------------------------------------------------------
# BertPretrainingCriterion.forward
# ---------------------------------------------------------------------------

def bert_pretraining_criterion(
    prediction_scores,       # [B, S, V] float (f32 or bf16)
    seq_relationship_score,  # [B, 2]    float
    masked_lm_labels,        # [B, S]    int (-1 = ignore)
    next_sentence_labels,    # [B]       int
    vocab_size,
    *,
    max_valid_rows=None,          # static int: B * max_predictions_per_seq -> sparse gather path
    mlm_tile_rows=None,           # dense-path tile overrides
    mlm_tile_classes=None,
    gather_rows_per_block=None,   # sparse-path tile overrides
    gather_rows_per_chunk=None,
):
    B, S, V = prediction_scores.shape
    assert V == vocab_size

    scores = prediction_scores.reshape(B * S, V)
    labels = masked_lm_labels.reshape(B * S).astype(jnp.int32)

    if max_valid_rows is None:
        mlm_sum = _mlm_ce_sum_dense(scores, labels, mlm_tile_rows, mlm_tile_classes)
    else:
        mlm_sum = _mlm_ce_sum_gather(scores, labels, max_valid_rows,
                                     gather_rows_per_block, gather_rows_per_chunk)

    # Mean over non-ignored positions (PyTorch reduction='mean'; NaN if none, like 0/0).
    num_valid = jnp.sum((labels != -1).astype(jnp.float32))
    masked_lm_loss = mlm_sum / num_valid

    next_sentence_loss = _cross_entropy_mean_jax(
        seq_relationship_score.reshape(-1, 2), next_sentence_labels.reshape(-1))
    return masked_lm_loss + next_sentence_loss


def _reference(prediction_scores, seq_relationship_score, mlm_labels, nsp_labels, V):
    def ce(scores, labels):
        scores = scores.astype(jnp.float32)
        lse = jax.nn.logsumexp(scores, axis=-1)
        picked = jnp.take_along_axis(scores, jnp.maximum(labels, 0)[:, None], axis=-1)[:, 0]
        valid = labels != -1
        per = jnp.where(valid, lse - picked, 0.0)
        return jnp.sum(per) / jnp.sum(valid.astype(jnp.float32))

    return ce(prediction_scores.reshape(-1, V), mlm_labels.reshape(-1)) + ce(
        seq_relationship_score.reshape(-1, 2), nsp_labels.reshape(-1))


if __name__ == "__main__":
    # Small shapes consistent with the module; V is NOT a multiple of 128 and N is NOT a
    # multiple of the row tile, to exercise the ragged / padded paths.
    B, S, V = 2, 12, 500
    key = jax.random.PRNGKey(0)
    k1, k2, k3, k4 = jax.random.split(key, 4)

    prediction_scores = jax.random.normal(k1, (B, S, V), dtype=jnp.float32)
    seq_relationship_score = jax.random.normal(k2, (B, 2), dtype=jnp.float32)

    masked_lm_labels = jax.random.randint(k3, (B, S), 0, V, dtype=jnp.int32)
    ignore_mask = (jnp.arange(B * S).reshape(B, S) % 2) == 0   # 12 of 24 rows labelled
    masked_lm_labels = jnp.where(ignore_mask, -1, masked_lm_labels)
    next_sentence_labels = jax.random.randint(k4, (B,), 0, 2, dtype=jnp.int32)

    ref = _reference(prediction_scores, seq_relationship_score,
                     masked_lm_labels, next_sentence_labels, V)

    # Dense streaming path (default).  Small tile overrides so multiple row tiles, multiple
    # class tiles and the ragged last class tile are all exercised.
    dense = bert_pretraining_criterion(
        prediction_scores, seq_relationship_score, masked_lm_labels,
        next_sentence_labels, vocab_size=V,
        mlm_tile_rows=16, mlm_tile_classes=128)
    dense = jax.block_until_ready(dense)
    assert jnp.allclose(dense, ref, rtol=1e-5, atol=1e-5), (dense, ref)

    # Sparse gather path: only the labelled rows' logits are DMA'd.  Small overrides
    # exercise multiple grid blocks, multiple double-buffered chunks and the padded
    # (label = -1) tail rows.
    sparse = bert_pretraining_criterion(
        prediction_scores, seq_relationship_score, masked_lm_labels,
        next_sentence_labels, vocab_size=V,
        max_valid_rows=16, gather_rows_per_block=8, gather_rows_per_chunk=4)
    sparse = jax.block_until_ready(sparse)
    assert jnp.allclose(sparse, ref, rtol=1e-5, atol=1e-5), (sparse, ref)

    print("KERNEL_OK")
</pallas_src>

<mosaic_0001>
module attributes {stable_mosaic.version = 11 : i64} {
  func.func @_dense_ce_kernel(%arg0: i32, %arg1: i32, %arg2: memref<16x128xf32, #tpu.memory_space<vmem>>, %arg3: memref<16x1xi32, #tpu.memory_space<vmem>>, %arg4: memref<16x1xf32, #tpu.memory_space<vmem>>, %arg5: memref<16x1xf32, #tpu.memory_space<vmem>>, %arg6: memref<16x1xf32, #tpu.memory_space<vmem>>, %arg7: memref<16x1xf32, #tpu.memory_space<vmem>>) attributes {dimension_semantics = [#tpu.dimension_semantics<parallel>, #tpu.dimension_semantics<arbitrary>], iteration_bounds = array<i64: 2, 4>, scalar_prefetch = 0 : i64, scratch_operands = 3 : i64, tpu.core_type = #tpu.core_type<tc>, window_params = [{transform_indices = @transform_0, window_bounds = array<i64: 16, 128>}, {transform_indices = @transform_1, window_bounds = array<i64: 16, 1>}, {transform_indices = @transform_2, window_bounds = array<i64: 16, 1>}]} {
    %c0_i32 = arith.constant 0 : i32
    %0 = arith.cmpi eq, %arg1, %c0_i32 : i32
    %1 = arith.extui %0 : i1 to i32
    %c0_i32_0 = arith.constant 0 : i32
    %2 = arith.cmpi ne, %1, %c0_i32_0 : i32
    scf.if %2 {
      %cst_22 = arith.constant 0xFF800000 : f32
      %43 = vector.broadcast %cst_22 : f32 to vector<16x1xf32>
      %c0_23 = arith.constant 0 : index
      %c0_24 = arith.constant 0 : index
      %44 = vector.load %arg5[%c0_23, %c0_24] : memref<16x1xf32, #tpu.memory_space<vmem>>, vector<16x1xf32>
      tpu.vector_store %arg5[%c0_23, %c0_24], %43 {strides = array<i32>} : memref<16x1xf32, #tpu.memory_space<vmem>>, vector<16x1xf32>,
      %cst_25 = arith.constant 0.000000e+00 : f32
      %45 = vector.broadcast %cst_25 : f32 to vector<16x1xf32>
      %c0_26 = arith.constant 0 : index
      %c0_27 = arith.constant 0 : index
      %46 = vector.load %arg6[%c0_26, %c0_27] : memref<16x1xf32, #tpu.memory_space<vmem>>, vector<16x1xf32>
      tpu.vector_store %arg6[%c0_26, %c0_27], %45 {strides = array<i32>} : memref<16x1xf32, #tpu.memory_space<vmem>>, vector<16x1xf32>,
      %cst_28 = arith.constant 0.000000e+00 : f32
      %47 = vector.broadcast %cst_28 : f32 to vector<16x1xf32>
      %c0_29 = arith.constant 0 : index
      %c0_30 = arith.constant 0 : index
      %48 = vector.load %arg7[%c0_29, %c0_30] : memref<16x1xf32, #tpu.memory_space<vmem>>, vector<16x1xf32>
      tpu.vector_store %arg7[%c0_29, %c0_30], %47 {strides = array<i32>} : memref<16x1xf32, #tpu.memory_space<vmem>>, vector<16x1xf32>,
    } else {
    }
    %c0 = arith.constant 0 : index
    %c0_1 = arith.constant 0 : index
    %3 = vector.load %arg2[%c0, %c0_1] : memref<16x128xf32, #tpu.memory_space<vmem>>, vector<16x128xf32>
    %c0_2 = arith.constant 0 : index
    %c0_3 = arith.constant 0 : index
    %4 = vector.load %arg3[%c0_2, %c0_3] : memref<16x1xi32, #tpu.memory_space<vmem>>, vector<16x1xi32>
    %5 = tpu.iota {dimensions = array<i32: 1>} : vector<16x128xi32>
    %c0_4 = arith.constant 0 : index
    %c0_5 = arith.constant 0 : index
    %6 = vector.load %arg7[%c0_4, %c0_5] : memref<16x1xf32, #tpu.memory_space<vmem>>, vector<16x1xf32>
    %c128_i32 = arith.constant 128 : i32
    %7 = arith.muli %arg1, %c128_i32 : i32
    %8 = vector.broadcast %7 : i32 to vector<16x1xi32>
    %9 = arith.subi %4, %8 : vector<16x1xi32>
    %10 = vector.broadcast %9 : vector<16x1xi32> to vector<16x128xi32>
    %11 = arith.cmpi eq, %5, %10 : vector<16x128xi32>
    %cst = arith.constant 0.000000e+00 : f32
    %12 = vector.broadcast %cst : f32 to vector<16x128xf32>
    %13 = arith.select %11, %3, %12 : vector<16x128xi1>, vector<16x128xf32>
    %cst_6 = arith.constant dense<0.000000e+00> : vector<16xf32>
    %14 = vector.multi_reduction <add>, %13, %cst_6 [1] : vector<16x128xf32> to vector<16xf32>
    %15 = vector.shape_cast %14 : vector<16xf32> to vector<16x1xf32>
    %16 = arith.addf %6, %15 : vector<16x1xf32>
    %c0_7 = arith.constant 0 : index
    %c0_8 = arith.constant 0 : index
    %17 = vector.load %arg7[%c0_7, %c0_8] : memref<16x1xf32, #tpu.memory_space<vmem>>, vector<16x1xf32>
    tpu.vector_store %arg7[%c0_7, %c0_8], %16 {strides = array<i32>} : memref<16x1xf32, #tpu.memory_space<vmem>>, vector<16x1xf32>,
    %c128_i32_9 = arith.constant 128 : i32
    %18 = arith.muli %arg1, %c128_i32_9 : i32
    %c500_i32 = arith.constant 500 : i32
    %19 = arith.subi %c500_i32, %18 : i32
    %20 = vector.broadcast %19 : i32 to vector<16x128xi32>
    %21 = arith.cmpi slt, %5, %20 : vector<16x128xi32>
    %cst_10 = arith.constant 0xFF800000 : f32
    %22 = vector.broadcast %cst_10 : f32 to vector<16x128xf32>
    %23 = arith.select %21, %3, %22 : vector<16x128xi1>, vector<16x128xf32>
    %c0_11 = arith.constant 0 : index
    %c0_12 = arith.constant 0 : index
    %24 = vector.load %arg5[%c0_11, %c0_12] : memref<16x1xf32, #tpu.memory_space<vmem>>, vector<16x1xf32>
    %cst_13 = arith.constant dense<0xFF800000> : vector<16xf32>
    %25 = vector.multi_reduction <maximumf>, %23, %cst_13 [1] : vector<16x128xf32> to vector<16xf32>
    %26 = vector.shape_cast %25 : vector<16xf32> to vector<16x1xf32>
    %27 = arith.maximumf %24, %26 : vector<16x1xf32>
    %c0_14 = arith.constant 0 : index
    %c0_15 = arith.constant 0 : index
    %28 = vector.load %arg6[%c0_14, %c0_15] : memref<16x1xf32, #tpu.memory_space<vmem>>, vector<16x1xf32>
    %29 = arith.subf %24, %27 : vector<16x1xf32>
    %30 = math.exp %29 : vector<16x1xf32>
    %31 = arith.mulf %28, %30 : vector<16x1xf32>
    %32 = vector.broadcast %27 : vector<16x1xf32> to vector<16x128xf32>
    %33 = arith.subf %23, %32 : vector<16x128xf32>
    %34 = math.exp %33 : vector<16x128xf32>
    %cst_16 = arith.constant dense<0.000000e+00> : vector<16xf32>
    %35 = vector.multi_reduction <add>, %34, %cst_16 [1] : vector<16x128xf32> to vector<16xf32>
    %36 = vector.shape_cast %35 : vector<16xf32> to vector<16x1xf32>
    %37 = arith.addf %31, %36 : vector<16x1xf32>
    %c0_17 = arith.constant 0 : index
    %c0_18 = arith.constant 0 : index
    %38 = vector.load %arg6[%c0_17, %c0_18] : memref<16x1xf32, #tpu.memory_space<vmem>>, vector<16x1xf32>
    tpu.vector_store %arg6[%c0_17, %c0_18], %37 {strides = array<i32>} : memref<16x1xf32, #tpu.memory_space<vmem>>, vector<16x1xf32>,
    %c0_19 = arith.constant 0 : index
    %c0_20 = arith.constant 0 : index
    %39 = vector.load %arg5[%c0_19, %c0_20] : memref<16x1xf32, #tpu.memory_space<vmem>>, vector<16x1xf32>
    tpu.vector_store %arg5[%c0_19, %c0_20], %27 {strides = array<i32>} : memref<16x1xf32, #tpu.memory_space<vmem>>, vector<16x1xf32>,
    %c3_i32 = arith.constant 3 : i32
    %40 = arith.cmpi eq, %arg1, %c3_i32 : i32
    %41 = arith.extui %40 : i1 to i32
    %c0_i32_21 = arith.constant 0 : i32
    %42 = arith.cmpi ne, %41, %c0_i32_21 : i32
    scf.if %42 {
      %c-1_i32 = arith.constant -1 : i32
      %43 = vector.broadcast %c-1_i32 : i32 to vector<16x1xi32>
      %44 = arith.cmpi ne, %4, %43 : vector<16x1xi32>
      %c0_22 = arith.constant 0 : index
      %c0_23 = arith.constant 0 : index
      %45 = vector.load %arg5[%c0_22, %c0_23] : memref<16x1xf32, #tpu.memory_space<vmem>>, vector<16x1xf32>
      %c0_24 = arith.constant 0 : index
      %c0_25 = arith.constant 0 : index
      %46 = vector.load %arg6[%c0_24, %c0_25] : memref<16x1xf32, #tpu.memory_space<vmem>>, vector<16x1xf32>
      %47 = math.log %46 : vector<16x1xf32>
      %48 = arith.addf %45, %47 : vector<16x1xf32>
      %c0_26 = arith.constant 0 : index
      %c0_27 = arith.constant 0 : index
      %49 = vector.load %arg7[%c0_26, %c0_27] : memref<16x1xf32, #tpu.memory_space<vmem>>, vector<16x1xf32>
      %50 = arith.subf %48, %49 : vector<16x1xf32>
      %cst_28 = arith.constant 0.000000e+00 : f32
      %51 = vector.broadcast %cst_28 : f32 to vector<16x1xf32>
      %52 = arith.select %44, %50, %51 : vector<16x1xi1>, vector<16x1xf32>
      %c0_29 = arith.constant 0 : index
      %c0_30 = arith.constant 0 : index
      %53 = vector.load %arg4[%c0_29, %c0_30] : memref<16x1xf32, #tpu.memory_space<vmem>>, vector<16x1xf32>
      tpu.vector_store %arg4[%c0_29, %c0_30], %52 {strides = array<i32>} : memref<16x1xf32, #tpu.memory_space<vmem>>, vector<16x1xf32>,
    } else {
    }
    return
  }
  func.func @transform_0(%arg0: i32, %arg1: i32) -> (i32, i32) {
    %c0_i32 = arith.constant 0 : i32
    return %arg0, %arg1 : i32, i32
  }
  func.func @transform_1(%arg0: i32, %arg1: i32) -> (i32, i32) {
    %c0_i32 = arith.constant 0 : i32
    %c0_i32_0 = arith.constant 0 : i32
    return %arg0, %c0_i32 : i32, i32
  }
  func.func @transform_2(%arg0: i32, %arg1: i32) -> (i32, i32) {
    %c0_i32 = arith.constant 0 : i32
    %c0_i32_0 = arith.constant 0 : i32
    return %arg0, %c0_i32 : i32, i32
  }
}

</mosaic_0001>

<llo_original>
// kernel: tpu_custom_call.1
$region0: #{tpu_custom_call.1}
  #allocation0 [shape = 'u32[]', space=smem, size = 0x4, offset = 0x4, fixed_abs, tag = 'smem constant byte address 0x4 - core index']
  #allocation1 [shape = 'u32[144,128]{1,0:T(1,128)}', space=vmem, size = 0x12000, scoped, tag = 'internal scratch']
  #allocation2 [shape = 'f32[16,1]{1,0:T(8,128)}', space=vmem, size = 0x2000, scoped, tag = 'scratch operand']
  #allocation3 [shape = 'f32[16,1]{1,0:T(8,128)}', space=vmem, size = 0x2000, scoped, tag = 'scratch operand']
  #allocation4 [shape = 'f32[16,1]{1,0:T(8,128)}', space=vmem, size = 0x2000, scoped, tag = 'scratch operand']
  %s0 = inlined_call_operand.hbm [shape: f32[24,500], index: 0, kind: input, shape index: {}]
  %s1 = inlined_call_operand.vmem [shape: s32[24,1], index: 1, kind: input, shape index: {}]
  %s2 = inlined_call_operand.vmem [shape: f32[24,1], index: 2, kind: output, shape index: {}]
  %s3 = sld [smem:[#allocation0]]
  $region101: #{tpu_custom_call.1} parent=0
    _
  %s5 = ssub.s32 1, %s3
  %s6 = scalar_select 0, %s5, %s3
  $region1: #{tpu_custom_call.1} parent=0
    #allocation5 [shape = 'u8[16384]{0}', space=vmem, size = 0x4000, scoped, tag = 'input window, operand 0']
    #allocation6 [shape = 's32[2]{0}', space=sflag, size = 0x8, scoped, tag = 'scoped memory for tpu_custom_call.1']
    #allocation7 [shape = 'u8[16384]{0}', space=vmem, size = 0x4000, scoped, tag = 'output window, operand 0']
    %7 = vsyncpa [#allocation6], 0
    %s8 = scalar_lea.sflag [#allocation6], 1
    %9 = vsyncpa %s8, 0
    loop: start=0, step=1, limit=10
    $region2: #{tpu_custom_call.1} parent=1 // loop_pre_header
      _
    $region3: #{tpu_custom_call.1} parent=1 // loop_header
      %s11 = sphi 0, %s15
      %p12 = scmp.ge.s32.totalorder %s11, 10
      %s18 = sphi 0, %s30
      %s19 = sphi 0, %s26
      %s20 = sphi 0, %s18
      %s21 = sphi 0, %s19
      %s22 = sphi 0, %s20
      %s23 = sphi 0, %s21
      %s35 = sphi 0, %s37
      %s38 = sphi 0, %s35
      %s39 = sphi 0, %s38
      %s55 = sphi 0, %s39
      %s61 = sphi 0, %s63
      %s64 = sphi 0, %s61
      %s65 = sphi 0, %s64
      %s81 = sphi 0, %s65
      %s87 = sphi 0, %s89
      %s90 = sphi 0, %s87
      %s91 = sphi 0, %s90
      %s107 = sphi 0, %s91
    $region4: #{tpu_custom_call.1} parent=1 // loop_header_branch
      %14 = sbr.rel (%p12) target = $region8
    $region5: #{tpu_custom_call.1} parent=1 // loop_body
      %s16 = ssub.s32 %s11, 1
      %s17 = ssub.s32 %s11, 2
      %s24 = sadd.s32 1, %s19
      %p25 = scmp.ge.s32.totalorder %s24, 4
      %s26 = scalar_select %p25, 0, %s24
      %s27 = sadd.s32 1, %s18
      %s28 = scalar_select %p25, %s27, %s18
      %p29 = scmp.ge.s32.totalorder %s28, 2
      %s30 = scalar_select %p29, 0, %s28
      %s31 = ssub.s32 %s18, %s30
      %s32 = ssub.s32 %s19, %s26
      %s33 = sor.u32 %s31, %s32
      %p34 = scmp.eq.s32.totalorder %s33, 0
      %s36 = sadd.s32 %s35, 1
      %s37 = scalar_select %p34, %s35, %s36
      %p40 = pneg %p34
      %p41 = scmp.eq.s32.totalorder %s11, 7
      %p42 = por %p40, %p41
      %p43 = scmp.ne.s32.totalorder %s35, %s38
      %p44 = scmp.eq.s32.totalorder %s11, 0
      %p45 = por %p43, %p44
      %p46 = scmp.ne.s32.totalorder %s35, %s38
      %p47 = scmp.eq.s32.totalorder %s16, 7
      %p48 = por %p46, %p47
      %p49 = scmp.ne.s32.totalorder %s38, %s39
      %p50 = scmp.eq.s32.totalorder %s16, 0
      %p51 = por %p49, %p50
      %p52 = scmp.ne.s32.totalorder %s38, %s39
      %p53 = scmp.eq.s32.totalorder %s17, 7
      %p54 = por %p52, %p53
      %p56 = scmp.ne.s32.totalorder %s39, %s55
      %p57 = scmp.eq.s32.totalorder %s17, 0
      %p58 = por %p56, %p57
      %s59 = ssub.s32 %s18, %s30
      %p60 = scmp.eq.s32.totalorder %s59, 0
      %s62 = sadd.s32 %s61, 1
      %s63 = scalar_select %p60, %s61, %s62
      %p66 = pneg %p60
      %p67 = scmp.eq.s32.totalorder %s11, 7
      %p68 = por %p66, %p67
      %p69 = scmp.ne.s32.totalorder %s61, %s64
      %p70 = scmp.eq.s32.totalorder %s11, 0
      %p71 = por %p69, %p70
      %p72 = scmp.ne.s32.totalorder %s61, %s64
      %p73 = scmp.eq.s32.totalorder %s16, 7
      %p74 = por %p72, %p73
      %p75 = scmp.ne.s32.totalorder %s64, %s65
      %p76 = scmp.eq.s32.totalorder %s16, 0
      %p77 = por %p75, %p76
      %p78 = scmp.ne.s32.totalorder %s64, %s65
      %p79 = scmp.eq.s32.totalorder %s17, 7
      %p80 = por %p78, %p79
      %p82 = scmp.ne.s32.totalorder %s65, %s81
      %p83 = scmp.eq.s32.totalorder %s17, 0
      %p84 = por %p82, %p83
      %s85 = ssub.s32 %s18, %s30
      %p86 = scmp.eq.s32.totalorder %s85, 0
      %s88 = sadd.s32 %s87, 1
      %s89 = scalar_select %p86, %s87, %s88
      %p92 = pneg %p86
      %p93 = scmp.eq.s32.totalorder %s11, 7
      %p94 = por %p92, %p93
      %p95 = scmp.ne.s32.totalorder %s87, %s90
      %p96 = scmp.eq.s32.totalorder %s11, 0
      %p97 = por %p95, %p96
      %p98 = scmp.ne.s32.totalorder %s87, %s90
      %p99 = scmp.eq.s32.totalorder %s16, 7
      %p100 = por %p98, %p99
      %p101 = scmp.ne.s32.totalorder %s90, %s91
      %p102 = scmp.eq.s32.totalorder %s16, 0
      %p103 = por %p101, %p102
      %p104 = scmp.ne.s32.totalorder %s90, %s91
      %p105 = scmp.eq.s32.totalorder %s17, 7
      %p106 = por %p104, %p105
      %p108 = scmp.ne.s32.totalorder %s91, %s107
      %p109 = scmp.eq.s32.totalorder %s17, 0
      %p110 = por %p108, %p109
      %p111 = scmp.le.s32.totalorder 1, %s11
      %p112 = scmp.lt.s32.totalorder %s11, 9
      %p113 = pnand %p111, %p112
      %p114 = pneg %p113
      // Predicated region
      $region9: #{tpu_custom_call.1} parent=5 // pred_check
        _
      $region10: #{tpu_custom_call.1} parent=5 // pred_check_branch
        %116 = sbr.rel (%p113) target = $region12
      $region11: #{tpu_custom_call.1} parent=5 // pred_region
        %s117 = ssub.s32 %s11, 1
      $region12: #{tpu_custom_call.1} parent=5 // pred_fallthru
        _
      %p118 = scmp.lt.s32.totalorder %s11, 8
      // Predicated region
      $region13: #{tpu_custom_call.1} parent=5 // pred_check
        %p119 = pneg %p118
      $region14: #{tpu_custom_call.1} parent=5 // pred_check_branch
        %121 = sbr.rel (%p119) target = $region16
      $region15: #{tpu_custom_call.1} parent=5 // pred_region
        // Predicated region
        $region17: #{tpu_custom_call.1} parent=15 // pred_check
          %p122 = pneg %p45
        $region18: #{tpu_custom_call.1} parent=15 // pred_check_branch
          %124 = sbr.rel (%p122) target = $region20
        $region19: #{tpu_custom_call.1} parent=15 // pred_region
          %s125 = sand.u32 %s35, 1
          %s126 = scalar_lea.sflag [#allocation6], %s125
          %s127 = sand.u32 %s35, 1
          %s128 = smul.addr %s127, 16
          %s129 = scalar_lea.vmem [#allocation5], %s128
          %s130 = smul.u32 2, %s18
          %s131 = ssub.s32 3, %s130
          %p132 = scmp.lt.s32.totalorder %s131, 2
          %s133 = scalar_select %p132, %s131, 2
          %s134 = smul.u32 128, %s133
          %s136 = ssub.s32 256, %s134
          %137 = vsyncadd %s126, %s136
          %p138 = scmp.ne.s32.totalorder 0, %s134
          %s139 = smul.addr %s130, 4
          %s140 = sadd.s32 %s19, %s139
          %s141 = smul.addr %s140, 128
          %s142 = scalar_lea.hbm %s0, %s141
          %s143 = smul.u32 8, %s133
          %s144 = sshll.u32 %s129, 4
          %s145 = int_to_ptr.vmem [resolvable:$true] %s144
          %s146 = sshll.u32 %s143, 4
          %150 = dma.hbm_to_vmem [thread:$0]  (%p138), %s142, %s146, %s145, %s126, 512, 128, 8
        $region20: #{tpu_custom_call.1} parent=15 // pred_fallthru
          _
        // Predicated region
        $region21: #{tpu_custom_call.1} parent=15 // pred_check
          %p151 = pneg %p71
        $region22: #{tpu_custom_call.1} parent=15 // pred_check_branch
          %153 = sbr.rel (%p151) target = $region24
        $region23: #{tpu_custom_call.1} parent=15 // pred_region
          %s154 = smul.u32 2, %s18
          %s155 = ssub.s32 3, %s154
          %p156 = scmp.lt.s32.totalorder %s155, 2
          %s157 = scalar_select %p156, %s155, 2
          %s158 = smul.u32 128, %s157
          %p159 = scmp.lt.s32.totalorder %s154, 2
          %s160 = scalar_select %p159, %s154, 2
          %s161 = smul.addr %s160, 8
          %s162 = scalar_lea.vmem %s1, %s161
          %s163 = smul.u32 2, %s18
          %s164 = ssub.s32 3, %s163
          %p165 = scmp.lt.s32.totalorder %s164, 2
          %s166 = scalar_select %p165, %s164, 2
          %s167 = smul.u32 128, %s166
        $region24: #{tpu_custom_call.1} parent=15 // pred_fallthru
          _
      $region16: #{tpu_custom_call.1} parent=5 // pred_fallthru
        _
      %p168 = scmp.le.s32.totalorder 1, %s11
      %p169 = scmp.lt.s32.totalorder %s11, 9
      %p170 = pnand %p168, %p169
      %p171 = pneg %p170
      // Predicated region
      $region25: #{tpu_custom_call.1} parent=5 // pred_check
        _
      $region26: #{tpu_custom_call.1} parent=5 // pred_check_branch
        %173 = sbr.rel (%p170) target = $region28
      $region27: #{tpu_custom_call.1} parent=5 // pred_region
        %s174 = ssub.s32 %s11, 1
        %s175 = sand.u32 %s38, 1
        %s176 = scalar_lea.sflag [#allocation6], %s175
        %s177 = sand.u32 %s38, 1
        %s178 = smul.addr %s177, 16
        %s179 = scalar_lea.vmem [#allocation5], %s178
        // Predicated region
        $region29: #{tpu_custom_call.1} parent=27 // pred_check
          %p180 = pneg %p51
        $region30: #{tpu_custom_call.1} parent=27 // pred_check_branch
          %182 = sbr.rel (%p180) target = $region32
        $region31: #{tpu_custom_call.1} parent=27 // pred_region
          %183 = dma.done %s176, 256
        $region32: #{tpu_custom_call.1} parent=27 // pred_fallthru
          _
        %s184 = sand.u32 %s38, 1
        %s185 = scalar_lea.sflag [#allocation6], %s184
        %s186 = sand.u32 %s38, 1
        %s187 = smul.addr %s186, 16
        %s188 = scalar_lea.vmem [#allocation5], %s187
        %p189 = pneg %p51
        %p190 = pneg %p48
        %s191 = smul.u32 2, %s20
        %s192 = ssub.s32 3, %s191
        %p193 = scmp.lt.s32.totalorder %s192, 2
        %s194 = scalar_select %p193, %s192, 2
        %s195 = smul.u32 128, %s194
        %p196 = scmp.lt.s32.totalorder %s191, 2
        %s197 = scalar_select %p196, %s191, 2
        %s198 = smul.addr %s197, 8
        %s199 = scalar_lea.vmem %s1, %s198
        %p200 = pneg %p77
        %p201 = pneg %p74
        %p202 = pneg %p103
        %p203 = pneg %p100
        %s204 = sand.u32 %s90, 1
        %s205 = sand.u32 %s90, 1
        %s206 = smul.addr %s205, 16
        %s207 = scalar_lea.vmem [#allocation7], %s206
        %s208 = smul.u32 2, %s20
        %s209 = ssub.s32 3, %s208
        %p210 = scmp.lt.s32.totalorder %s209, 2
        %s211 = scalar_select %p210, %s209, 2
        %s212 = smul.u32 128, %s211
        %s213 = smul.u32 2, %s20
        %s214 = ssub.s32 3, %s213
        %p215 = scmp.lt.s32.totalorder %s214, 2
        %s216 = scalar_select %p215, %s214, 2
        %s217 = smul.u32 128, %s216
        %p218 = scmp.lt.s32.totalorder %s213, 2
        %s219 = scalar_select %p218, %s213, 2
        %s220 = smul.addr %s219, 8
        %s221 = scalar_lea.vmem %s1, %s220
        %s222 = smul.u32 2, %s20
        %s223 = ssub.s32 3, %s222
        %p224 = scmp.lt.s32.totalorder %s223, 2
        %s225 = scalar_select %p224, %s223, 2
        %s226 = smul.u32 128, %s225
        %s227 = smul.u32 2, %s20
        %s228 = ssub.s32 3, %s227
        %p229 = scmp.lt.s32.totalorder %s228, 2
        %s230 = scalar_select %p229, %s228, 2
        %s231 = smul.u32 128, %s230
        %p232 = scmp.eq.s32.totalorder %s21, 0
        // Predicated region
        $region33: #{tpu_custom_call.1} parent=27 // pred_check
          %p233 = pneg %p232
        $region34: #{tpu_custom_call.1} parent=27 // pred_check_branch
          %235 = sbr.rel (%p233) target = $region36
        $region35: #{tpu_custom_call.1} parent=27 // pred_region
          %vm236 = vcmask 7168
          %237 = vst.msk [vmem:[#allocation2] sm:$0xff] %vm236, -inf
          %238 = vst.msk [vmem:[#allocation2 + $0x8] sm:$0xff] %vm236, -inf
          %239 = vst.msk [vmem:[#allocation3] sm:$0xff] %vm236, 0.0
          %240 = vst.msk [vmem:[#allocation3 + $0x8] sm:$0xff] %vm236, 0.0
          %241 = vst.msk [vmem:[#allocation4] sm:$0xff] %vm236, 0.0
          %242 = vst.msk [vmem:[#allocation4 + $0x8] sm:$0xff] %vm236, 0.0
        $region36: #{tpu_custom_call.1} parent=27 // pred_fallthru
          _
        %v243 = vld [vmem:[%s179] sm:$0xff]
        %v244 = vld [vmem:[%s179 + $0x8] sm:$0xff]
        %v245 = vld [vmem:[%s221] sm:$0xff]
        %v246 = vld [vmem:[%s221 + $0x8] sm:$0xff]
        %v247 = vlaneseq
        %v248 = vand.u32 %v247, 127
        %v249 = vld [vmem:[#allocation4] sm:$0xff]
        %v250 = vld [vmem:[#allocation4 + $0x8] sm:$0xff]
        %s251 = smul.u32 %s21, 128
        %v252 = vstv %s251
        %v253 = vsub.s32 %v245, %v252
        %v254 = vsub.s32 %v246, %v252
        %255 = vset.pattern.permute.xlu0 0
        %256 = vperm.xlu0 %255, %v253
        %v257 = vpop.permute.xlu0 %256
        %258 = vset.pattern.permute.xlu0 0
        %259 = vperm.xlu0 %258, %v254
        %v260 = vpop.permute.xlu0 %259
        %vm261 = vcmp.eq.s32.totalorder %v248, %v257
        %vm262 = vcmp.eq.s32.totalorder %v248, %v260
        %v263 = vsel %vm261, %v243, 0.0
        %v264 = vsel %vm262, %v244, 0.0
        %265 = vadd.xlane.f32.xlu0 %v263
        %v266 = vpop.xlane.xlu0 %265
        %267 = vadd.xlane.f32.xlu0 %v264
        %v268 = vpop.xlane.xlu0 %267
        %v269 = vadd.f32 %v249, %v266
        %v270 = vadd.f32 %v250, %v268
        %vm271 = vcmask 7168
        %272 = vst.msk [vmem:[#allocation4] sm:$0xff] %vm271, %v269
        %273 = vst.msk [vmem:[#allocation4 + $0x8] sm:$0xff] %vm271, %v270
        %s274 = ssub.s32 500, %s251
        %v275 = vstv %s274
        %vm276 = vcmp.lt.s32.totalorder %v248, %v275
        %v277 = vsel %vm276, %v243, -inf
        %v278 = vsel %vm276, %v244, -inf
        %v279 = vld [vmem:[#allocation2] sm:$0xff]
        %v280 = vld [vmem:[#allocation2 + $0x8] sm:$0xff]
        %281 = vmax.xlane.f32.xlu0 %v277
        %v282 = vpop.xlane.xlu0 %281
        %283 = vmax.xlane.f32.xlu0 %v278
        %v284 = vpop.xlane.xlu0 %283
        %v285 = vmax.f32 %v279, %v282
        %v286 = vmax.f32 %v280, %v284
        %v287 = vld [vmem:[#allocation3] sm:$0xff]
        %v288 = vld [vmem:[#allocation3 + $0x8] sm:$0xff]
        %v289 = vsub.f32 %v279, %v285
        %v290 = vsub.f32 %v280, %v286
        %v291 = vmul.f32 %v289, 1.442695
        %v292 = vpow.pop %v291
        %v293 = vmul.f32 %v290, 1.442695
        %v294 = vpow.pop %v293
        %v295 = vmul.f32 %v287, %v292
        %v296 = vmul.f32 %v288, %v294
        %298 = vset.pattern.permute.xlu0 0
        %299 = vperm.xlu0 %298, %v285
        %v300 = vpop.permute.xlu0 %299
        %303 = vset.pattern.permute.xlu0 0
        %304 = vperm.xlu0 %303, %v286
        %v305 = vpop.permute.xlu0 %304
        %v307 = vsub.f32 %v277, %v300
        %v308 = vsub.f32 %v278, %v305
        %v309 = vmul.f32 %v307, 1.442695
        %v310 = vpow.pop %v309
        %v311 = vmul.f32 %v308, 1.442695
        %v312 = vpow.pop %v311
        %313 = vadd.xlane.f32.xlu0 %v310
        %v314 = vpop.xlane.xlu0 %313
        %315 = vadd.xlane.f32.xlu0 %v312
        %v316 = vpop.xlane.xlu0 %315
        %v317 = vadd.f32 %v295, %v314
        %v318 = vadd.f32 %v296, %v316
        %319 = vst.msk [vmem:[#allocation3] sm:$0xff] %vm271, %v317
        %320 = vst.msk [vmem:[#allocation3 + $0x8] sm:$0xff] %vm271, %v318
        %321 = vst.msk [vmem:[#allocation2] sm:$0xff] %vm271, %v285
        %322 = vst.msk [vmem:[#allocation2 + $0x8] sm:$0xff] %vm271, %v286
        %p323 = scmp.eq.s32.totalorder %s21, 3
        // Predicated region
        $region37: #{tpu_custom_call.1} parent=27 // pred_check
          %p324 = pneg %p323
        $region38: #{tpu_custom_call.1} parent=27 // pred_check_branch
          %326 = sbr.rel (%p324) target = $region40
        $region39: #{tpu_custom_call.1} parent=27 // pred_region
          %vm327 = vcmp.ne.s32.totalorder %v245, 4294967295
          %vm328 = vcmp.ne.s32.totalorder %v246, 4294967295
          %v329 = vld [vmem:[#allocation2] sm:$0xff]
          %v330 = vld [vmem:[#allocation2 + $0x8] sm:$0xff]
          %v331 = vld [vmem:[#allocation3] sm:$0xff]
          %v332 = vld [vmem:[#allocation3 + $0x8] sm:$0xff]
          %v333 = vlog2.pop %v331
          %v334 = vmul.f32 %v333, 0.6931472
          %v335 = vlog2.pop %v332
          %v336 = vmul.f32 %v335, 0.6931472
          %v337 = vadd.f32 %v329, %v334
          %v338 = vadd.f32 %v330, %v336
          %v339 = vld [vmem:[#allocation4] sm:$0xff]
          %v340 = vld [vmem:[#allocation4 + $0x8] sm:$0xff]
          %v341 = vsub.f32 %v337, %v339
          %v342 = vsub.f32 %v338, %v340
          %v343 = vsel %vm327, %v341, 0.0
          %v344 = vsel %vm328, %v342, 0.0
          %345 = vst.msk [vmem:[%s207] sm:$0xff] %vm271, %v343
          %346 = vst.msk [vmem:[%s207 + $0x8] sm:$0xff] %vm271, %v344
        $region40: #{tpu_custom_call.1} parent=27 // pred_fallthru
          _
        %s347 = sand.u32 %s90, 1
        %s348 = sand.u32 %s90, 1
        %s349 = smul.addr %s348, 16
        %s350 = scalar_lea.vmem [#allocation7], %s349
        // Predicated region
        $region41: #{tpu_custom_call.1} parent=27 // pred_check
          %p351 = pneg %p100
        $region42: #{tpu_custom_call.1} parent=27 // pred_check_branch
          %353 = sbr.rel (%p351) target = $region44
        $region43: #{tpu_custom_call.1} parent=27 // pred_region
          %s354 = smul.u32 2, %s20
          %s355 = ssub.s32 3, %s354
          %p356 = scmp.lt.s32.totalorder %s355, 2
          %s357 = scalar_select %p356, %s355, 2
          %s358 = smul.u32 128, %s357
          %p359 = scmp.ne.s32.totalorder 0, %s358
          %s360 = smul.addr %s354, 8
          %s361 = scalar_lea.vmem %s2, %s360
          // Predicated region
          $region45: #{tpu_custom_call.1} parent=43 // pred_check
            %p362 = pneg %p359
          $region46: #{tpu_custom_call.1} parent=43 // pred_check_branch
            %364 = sbr.rel (%p362) target = $region48
          $region47: #{tpu_custom_call.1} parent=43 // pred_region
            // Predicated region
            $region49: #{tpu_custom_call.1} parent=47 // pred_check
              _
            $region50: #{tpu_custom_call.1} parent=47 // pred_check_branch
              %366 = sbr.rel (0) target = $region52
            $region51: #{tpu_custom_call.1} parent=47 // pred_region
              // Predicated region
              $region71: #{tpu_custom_call.1} parent=51 // pred_check
                _
              $region72: #{tpu_custom_call.1} parent=51 // pred_check_branch
                %418 = sbr.rel (0) target = $region74
              $region73: #{tpu_custom_call.1} parent=51 // pred_region
                %s419 = sshrl.u32 %s357, 1
                // While loop
                $region75: #{tpu_custom_call.1} parent=73 // loop_pre_header
                  _
                $region76: #{tpu_custom_call.1} parent=73 // loop_header
                  %s421 = sphi 0, %s423
                  %p422 = scmp.ge.s32.totalorder %s421, %s419
                  %s426 = sphi 0, %s435
                  %s427 = sphi %s350, %s438
                  %s428 = sphi %s361, %s439
                $region77: #{tpu_custom_call.1} parent=73 // loop_header_branch
                  %425 = sbr.rel (%p422) target = $region81
                $region78: #{tpu_custom_call.1} parent=73 // loop_body
                  %v429 = vld [vmem:[%s427] sm:$0xff]
                  %430 = vst [vmem:[%s428] sm:$0xff] %v429
                  %v431 = vld [vmem:[%s427 + $0x8] sm:$0xff]
                  %432 = vst [vmem:[%s428 + $0x8] sm:$0xff] %v431
                  %s433 = sadd.s32 1, %s426
                  %p434 = scmp.ge.s32.totalorder %s433, %s419
                  %s435 = scalar_select %p434, 0, %s433
                  %s436 = smul.u32 %s435, 16
                  %s437 = smul.u32 %s435, 16
                  %s438 = scalar_lea.vmem %s350, %s436 [#allocation7]
                  %s439 = scalar_lea.vmem %s361, %s437
                $region79: #{tpu_custom_call.1} parent=73 // loop_footer
                  %s423 = sadd.s32 %s421, 1
                $region80: #{tpu_custom_call.1} parent=73 // loop_footer_branch
                  %420 = sbr.rel target = $region76
                $region81: #{tpu_custom_call.1} parent=73 // loop_exit
                  _
                %s440 = sshrl.u32 %s357, 1
                %s441 = sand.u32 %s357, 1
                %s442 = smul.u32 %s440, 2
                %s443 = smul.u32 8, %s442
                %s444 = scalar_lea.vmem %s350, %s443 [#allocation7]
                %s445 = smul.u32 8, %s442
                %s446 = scalar_lea.vmem %s361, %s445
                // While loop
                $region82: #{tpu_custom_call.1} parent=73 // loop_pre_header
                  _
                $region83: #{tpu_custom_call.1} parent=73 // loop_header
                  %s448 = sphi 0, %s450
                  %p449 = scmp.ge.s32.totalorder %s448, %s441
                  %s453 = sphi 0, %s460
                  %s454 = sphi %s444, %s463
                  %s455 = sphi %s446, %s464
                $region84: #{tpu_custom_call.1} parent=73 // loop_header_branch
                  %452 = sbr.rel (%p449) target = $region88
                $region85: #{tpu_custom_call.1} parent=73 // loop_body
                  %v456 = vld [vmem:[%s454] sm:$0xff]
                  %457 = vst [vmem:[%s455] sm:$0xff] %v456
                  %s458 = sadd.s32 1, %s453
                  %p459 = scmp.ge.s32.totalorder %s458, %s441
                  %s460 = scalar_select %p459, 0, %s458
                  %s461 = smul.u32 %s460, 8
                  %s462 = smul.u32 %s460, 8
                  %s463 = scalar_lea.vmem %s444, %s461 [#allocation7]
                  %s464 = scalar_lea.vmem %s446, %s462
                $region86: #{tpu_custom_call.1} parent=73 // loop_footer
                  %s450 = sadd.s32 %s448, 1
                $region87: #{tpu_custom_call.1} parent=73 // loop_footer_branch
                  %447 = sbr.rel target = $region83
                $region88: #{tpu_custom_call.1} parent=73 // loop_exit
                  _
              $region74: #{tpu_custom_call.1} parent=51 // pred_fallthru
                _
              // Predicated region
              $region89: #{tpu_custom_call.1} parent=51 // pred_check
                _
              $region90: #{tpu_custom_call.1} parent=51 // pred_check_branch
                %466 = sbr.rel target = $region92
              $region91: #{tpu_custom_call.1} parent=51 // pred_region
                _
              $region92: #{tpu_custom_call.1} parent=51 // pred_fallthru
                _
            $region52: #{tpu_custom_call.1} parent=47 // pred_fallthru
              _
            // Predicated region
            $region53: #{tpu_custom_call.1} parent=47 // pred_check
              _
            $region54: #{tpu_custom_call.1} parent=47 // pred_check_branch
              %368 = sbr.rel target = $region56
            $region55: #{tpu_custom_call.1} parent=47 // pred_region
              %s370 = ssub.s32 256, 1
              %s371 = sshrl.u32 %s357, 1
              // While loop
              $region57: #{tpu_custom_call.1} parent=55 // loop_pre_header
                _
              $region58: #{tpu_custom_call.1} parent=55 // loop_header
                %s373 = sphi 0, %s375
                %p374 = scmp.ge.s32.totalorder %s373, %s371
                %s378 = sphi 0, %s387
                %s379 = sphi %s350, %s390
                %s380 = sphi %s361, %s391
              $region59: #{tpu_custom_call.1} parent=55 // loop_header_branch
                %377 = sbr.rel (%p374) target = $region63
              $region60: #{tpu_custom_call.1} parent=55 // loop_body
                %v381 = vld [vmem:[%s379] sm:%s370]
                %382 = vst [vmem:[%s380] sm:%s370] %v381
                %v383 = vld [vmem:[%s379 + $0x8] sm:%s370]
                %384 = vst [vmem:[%s380 + $0x8] sm:%s370] %v383
                %s385 = sadd.s32 1, %s378
                %p386 = scmp.ge.s32.totalorder %s385, %s371
                %s387 = scalar_select %p386, 0, %s385
                %s388 = smul.u32 %s387, 16
                %s389 = smul.u32 %s387, 16
                %s390 = scalar_lea.vmem %s350, %s388 [#allocation7]
                %s391 = scalar_lea.vmem %s361, %s389
              $region61: #{tpu_custom_call.1} parent=55 // loop_footer
                %s375 = sadd.s32 %s373, 1
              $region62: #{tpu_custom_call.1} parent=55 // loop_footer_branch
                %372 = sbr.rel target = $region58
              $region63: #{tpu_custom_call.1} parent=55 // loop_exit
                _
              %s392 = sshrl.u32 %s357, 1
              %s393 = sand.u32 %s357, 1
              %s394 = smul.u32 %s392, 2
              %s395 = smul.u32 8, %s394
              %s396 = scalar_lea.vmem %s350, %s395 [#allocation7]
              %s397 = smul.u32 8, %s394
              %s398 = scalar_lea.vmem %s361, %s397
              // While loop
              $region64: #{tpu_custom_call.1} parent=55 // loop_pre_header
                _
              $region65: #{tpu_custom_call.1} parent=55 // loop_header
                %s400 = sphi 0, %s402
                %p401 = scmp.ge.s32.totalorder %s400, %s393
                %s405 = sphi 0, %s412
                %s406 = sphi %s396, %s415
                %s407 = sphi %s398, %s416
              $region66: #{tpu_custom_call.1} parent=55 // loop_header_branch
                %404 = sbr.rel (%p401) target = $region70
              $region67: #{tpu_custom_call.1} parent=55 // loop_body
                %v408 = vld [vmem:[%s406] sm:%s370]
                %409 = vst [vmem:[%s407] sm:%s370] %v408
                %s410 = sadd.s32 1, %s405
                %p411 = scmp.ge.s32.totalorder %s410, %s393
                %s412 = scalar_select %p411, 0, %s410
                %s413 = smul.u32 %s412, 8
                %s414 = smul.u32 %s412, 8
                %s415 = scalar_lea.vmem %s396, %s413 [#allocation7]
                %s416 = scalar_lea.vmem %s398, %s414
              $region68: #{tpu_custom_call.1} parent=55 // loop_footer
                %s402 = sadd.s32 %s400, 1
              $region69: #{tpu_custom_call.1} parent=55 // loop_footer_branch
                %399 = sbr.rel target = $region65
              $region70: #{tpu_custom_call.1} parent=55 // loop_exit
                _
            $region56: #{tpu_custom_call.1} parent=47 // pred_fallthru
              _
          $region48: #{tpu_custom_call.1} parent=43 // pred_fallthru
            _
          %467 = vnop
        $region44: #{tpu_custom_call.1} parent=27 // pred_fallthru
          _
      $region28: #{tpu_custom_call.1} parent=5 // pred_fallthru
        _
      %p468 = scmp.le.s32.totalorder 2, %s11
      // Predicated region
      $region93: #{tpu_custom_call.1} parent=5 // pred_check
        %p469 = pneg %p468
      $region94: #{tpu_custom_call.1} parent=5 // pred_check_branch
        %471 = sbr.rel (%p469) target = $region96
      $region95: #{tpu_custom_call.1} parent=5 // pred_region
        %s472 = ssub.s32 %s11, 2
        // Predicated region
        $region97: #{tpu_custom_call.1} parent=95 // pred_check
          %p473 = pneg %p106
        $region98: #{tpu_custom_call.1} parent=95 // pred_check_branch
          %475 = sbr.rel (%p473) target = $region100
        $region99: #{tpu_custom_call.1} parent=95 // pred_region
          %s476 = sand.u32 %s91, 1
          %s477 = sand.u32 %s91, 1
          %s478 = smul.addr %s477, 16
          %s479 = scalar_lea.vmem [#allocation7], %s478
        $region100: #{tpu_custom_call.1} parent=95 // pred_fallthru
          _
      $region96: #{tpu_custom_call.1} parent=5 // pred_fallthru
        _
    $region6: #{tpu_custom_call.1} parent=1 // loop_footer
      %s15 = sadd.s32 1, %s11
    $region7: #{tpu_custom_call.1} parent=1 // loop_footer_branch
      %10 = sbr.rel target = $region3
    $region8: #{tpu_custom_call.1} parent=1 // loop_exit
      _
    %480 = vsyncpa [#allocation6], 1
    %s481 = scalar_lea.sflag [#allocation6], 1
    %482 = vsyncpa %s481, 1

</llo_original>
